<compile_context>
chip_gen: v7x
topology: tpu7x:2x2x1
jax: 0.10.0
libtpu: 0.0.40
codegen_flags: <defaults>
</compile_context>

<pallas_src>
import jax
import jax.numpy as jnp
from jax.experimental import pallas as pl
from jax.experimental.pallas import tpu as pltpu

INPUT_SIZE = 3
HIDDEN = 256
OUTPUT_SIZE = 3
W3_PAD = 128  # layer-3 weight padded to a lane-dense MXU width


def _round_up(x, m):
    return (x + m - 1) // m * m


def policy_net_kernel(x_ref, w1_ref, b1_ref, w2_ref, b2_ref, w3_ref, b3_ref, o_ref):
    # ---- Layer 1 (K = 3): VPU broadcast multiply-adds, f32 -------------------
    x = x_ref[...]                    # (tm, 3)   f32
    w1 = w1_ref[...]                  # (3, 256)  f32
    h1 = (b1_ref[...]
          + x[:, 0:1] * w1[0:1, :]
          + x[:, 1:2] * w1[1:2, :]
          + x[:, 2:3] * w1[2:3, :])
    h1 = jnp.maximum(h1, 0.0)

    # ---- Layer 2: bf16 MXU matmul (pre-cast weights), f32 acc + bias + ReLU --
    h2 = jnp.dot(h1.astype(jnp.bfloat16), w2_ref[...],
                 preferred_element_type=jnp.float32) + b2_ref[...]
    h2 = jnp.maximum(h2, 0.0)

    # ---- Layer 3: bf16 MXU matmul into padded lanes, narrow store ------------
    out = jnp.dot(h2.astype(jnp.bfloat16), w3_ref[...],
                  preferred_element_type=jnp.float32) + b3_ref[...]
    o_ref[...] = out[:, :OUTPUT_SIZE].astype(o_ref.dtype)


def policy_net_forward(x, params, *, tm=1024):
    """x: (B, INPUT_SIZE) f32. params: dict of w1,b1,w2,b2,w3,b3 (f32)."""
    B = x.shape[0]
    w1, b1 = params["w1"], params["b1"]
    w2, b2 = params["w2"], params["b2"]
    w3, b3 = params["w3"], params["b3"]

    # Pre-cast MXU weights to bf16 (one-time, outside the kernel).
    w2_bf = w2.astype(jnp.bfloat16)
    # Zero-pad layer-3 weights/bias to a lane-dense MXU width; bias stays f32.
    w3p = jnp.zeros((HIDDEN, W3_PAD), jnp.bfloat16).at[:, :OUTPUT_SIZE].set(
        w3.astype(jnp.bfloat16))
    b3p = jnp.zeros((1, W3_PAD), jnp.float32).at[:, :OUTPUT_SIZE].set(b3)

    # Batch tile: large for big B to amortize the ~0.35 us per-step pipeline
    # overhead, shrunk (multiple of 8) for small batches.
    tm = min(tm, _round_up(B, 8))
    # v7x megacore: keep >=2 grid steps for large batches so the "parallel"
    # batch axis shards across both TensorCores.
    if B >= 512:
        tm = min(tm, _round_up(pl.cdiv(B, 2), 8))
    grid = (pl.cdiv(B, tm),)

    def resident(shape):
        # Constant index_map -> weights stay resident in VMEM across the grid.
        return pl.BlockSpec(shape, lambda i: (0, 0))

    flops = 2 * B * (INPUT_SIZE * HIDDEN + HIDDEN * HIDDEN + HIDDEN * W3_PAD)
    bytes_accessed = (4 * (B * INPUT_SIZE + B * OUTPUT_SIZE)            # x, out
                      + 4 * (INPUT_SIZE * HIDDEN + HIDDEN)              # w1, b1
                      + 2 * HIDDEN * HIDDEN + 4 * HIDDEN                # w2, b2
                      + 2 * HIDDEN * W3_PAD + 4 * W3_PAD)               # w3, b3

    out = pl.pallas_call(
        policy_net_kernel,
        out_shape=jax.ShapeDtypeStruct((B, OUTPUT_SIZE), jnp.float32),
        grid=grid,
        in_specs=[
            pl.BlockSpec((tm, INPUT_SIZE), lambda i: (i, 0)),   # x: batch-tiled
            resident(w1.shape), resident(b1.shape),
            resident(w2_bf.shape), resident(b2.shape),
            resident(w3p.shape), resident(b3p.shape),
        ],
        out_specs=pl.BlockSpec((tm, OUTPUT_SIZE), lambda i: (i, 0)),
        compiler_params=pltpu.CompilerParams(
            dimension_semantics=("parallel",)),
        cost_estimate=pl.CostEstimate(flops=flops,
                                      bytes_accessed=bytes_accessed,
                                      transcendentals=0),
    )(x, w1, b1, w2_bf, b2, w3p, b3p)

    return out


def init_params(key):
    """Deterministic init mimicking PyTorch nn.Linear default (U[-1/sqrt(fan_in), +])."""
    ks = jax.random.split(key, 6)

    def linear(kw, kb, fan_in, fan_out):
        bound = 1.0 / jnp.sqrt(jnp.float32(fan_in))
        # stored transposed relative to PyTorch: (in, out)
        w = jax.random.uniform(kw, (fan_in, fan_out), jnp.float32, -bound, bound)
        b = jax.random.uniform(kb, (1, fan_out), jnp.float32, -bound, bound)
        return w, b

    w1, b1 = linear(ks[0], ks[1], INPUT_SIZE, HIDDEN)
    w2, b2 = linear(ks[2], ks[3], HIDDEN, HIDDEN)
    w3, b3 = linear(ks[4], ks[5], HIDDEN, OUTPUT_SIZE)
    return {"w1": w1, "b1": b1, "w2": w2, "b2": b2, "w3": w3, "b3": b3}


def reference_forward(x, params):
    h1 = jnp.maximum(x @ params["w1"] + params["b1"], 0.0)
    h2 = jnp.maximum(h1 @ params["w2"] + params["b2"], 0.0)
    return h2 @ params["w3"] + params["b3"]


if __name__ == "__main__":
    key = jax.random.PRNGKey(0)
    pkey, xkey = jax.random.split(key)

    params = init_params(pkey)
    B = 8
    x = jax.random.normal(xkey, (B, INPUT_SIZE), jnp.float32)

    out = policy_net_forward(x, params)
    out = jax.block_until_ready(out)

    ref = reference_forward(x, params)
    assert out.shape == (B, OUTPUT_SIZE)
    # Layers 2/3 run in bf16 with f32 accumulation -> loosened tolerance vs f32 ref.
    assert jnp.allclose(out, ref, atol=5e-2, rtol=5e-2)

    print("KERNEL_OK")
</pallas_src>

<mosaic_0001>
module attributes {stable_mosaic.version = 11 : i64} {
  func.func @policy_net_kernel(%arg0: i32, %arg1: memref<8x3xf32, #tpu.memory_space<vmem>>, %arg2: memref<3x256xf32, #tpu.memory_space<vmem>>, %arg3: memref<1x256xf32, #tpu.memory_space<vmem>>, %arg4: memref<256x256xbf16, #tpu.memory_space<vmem>>, %arg5: memref<1x256xf32, #tpu.memory_space<vmem>>, %arg6: memref<256x128xbf16, #tpu.memory_space<vmem>>, %arg7: memref<1x128xf32, #tpu.memory_space<vmem>>, %arg8: memref<8x3xf32, #tpu.memory_space<vmem>>) attributes {dimension_semantics = [#tpu.dimension_semantics<parallel>], iteration_bounds = array<i64: 1>, scalar_prefetch = 0 : i64, scratch_operands = 0 : i64, tpu.core_type = #tpu.core_type<tc>, window_params = [{transform_indices = @transform_0, window_bounds = array<i64: 8, 3>}, {pipeline_mode = #tpu.pipeline_mode<synchronous>, transform_indices = @transform_1, window_bounds = array<i64: 3, 256>}, {pipeline_mode = #tpu.pipeline_mode<synchronous>, transform_indices = @transform_2, window_bounds = array<i64: 1, 256>}, {pipeline_mode = #tpu.pipeline_mode<synchronous>, transform_indices = @transform_3, window_bounds = array<i64: 256, 256>}, {pipeline_mode = #tpu.pipeline_mode<synchronous>, transform_indices = @transform_4, window_bounds = array<i64: 1, 256>}, {pipeline_mode = #tpu.pipeline_mode<synchronous>, transform_indices = @transform_5, window_bounds = array<i64: 256, 128>}, {pipeline_mode = #tpu.pipeline_mode<synchronous>, transform_indices = @transform_6, window_bounds = array<i64: 1, 128>}, {transform_indices = @transform_7, window_bounds = array<i64: 8, 3>}]} {
    %c0 = arith.constant 0 : index
    %c0_0 = arith.constant 0 : index
    %0 = vector.load %arg1[%c0, %c0_0] : memref<8x3xf32, #tpu.memory_space<vmem>>, vector<8x3xf32>
    %c0_1 = arith.constant 0 : index
    %c0_2 = arith.constant 0 : index
    %1 = vector.load %arg2[%c0_1, %c0_2] : memref<3x256xf32, #tpu.memory_space<vmem>>, vector<3x256xf32>
    %c0_3 = arith.constant 0 : index
    %c0_4 = arith.constant 0 : index
    %2 = vector.load %arg3[%c0_3, %c0_4] : memref<1x256xf32, #tpu.memory_space<vmem>>, vector<1x256xf32>
    %3 = vector.extract_strided_slice %0 {offsets = [0, 0], sizes = [8, 1], strides = [1, 1]} : vector<8x3xf32> to vector<8x1xf32>
    %4 = vector.extract_strided_slice %1 {offsets = [0, 0], sizes = [1, 256], strides = [1, 1]} : vector<3x256xf32> to vector<1x256xf32>
    %5 = vector.broadcast %3 : vector<8x1xf32> to vector<8x256xf32>
    %6 = vector.broadcast %4 : vector<1x256xf32> to vector<8x256xf32>
    %7 = arith.mulf %5, %6 : vector<8x256xf32>
    %8 = vector.broadcast %2 : vector<1x256xf32> to vector<8x256xf32>
    %9 = arith.addf %8, %7 : vector<8x256xf32>
    %10 = vector.extract_strided_slice %0 {offsets = [0, 1], sizes = [8, 1], strides = [1, 1]} : vector<8x3xf32> to vector<8x1xf32>
    %11 = vector.extract_strided_slice %1 {offsets = [1, 0], sizes = [1, 256], strides = [1, 1]} : vector<3x256xf32> to vector<1x256xf32>
    %12 = vector.broadcast %10 : vector<8x1xf32> to vector<8x256xf32>
    %13 = vector.broadcast %11 : vector<1x256xf32> to vector<8x256xf32>
    %14 = arith.mulf %12, %13 : vector<8x256xf32>
    %15 = arith.addf %9, %14 : vector<8x256xf32>
    %16 = vector.extract_strided_slice %0 {offsets = [0, 2], sizes = [8, 1], strides = [1, 1]} : vector<8x3xf32> to vector<8x1xf32>
    %17 = vector.extract_strided_slice %1 {offsets = [2, 0], sizes = [1, 256], strides = [1, 1]} : vector<3x256xf32> to vector<1x256xf32>
    %18 = vector.broadcast %16 : vector<8x1xf32> to vector<8x256xf32>
    %19 = vector.broadcast %17 : vector<1x256xf32> to vector<8x256xf32>
    %20 = arith.mulf %18, %19 : vector<8x256xf32>
    %21 = arith.addf %15, %20 : vector<8x256xf32>
    %cst = arith.constant 0.000000e+00 : f32
    %22 = vector.broadcast %cst : f32 to vector<8x256xf32>
    %23 = arith.maximumf %21, %22 : vector<8x256xf32>
    %24 = arith.truncf %23 : vector<8x256xf32> to vector<8x256xbf16>
    %c0_5 = arith.constant 0 : index
    %c0_6 = arith.constant 0 : index
    %25 = vector.load %arg4[%c0_5, %c0_6] : memref<256x256xbf16, #tpu.memory_space<vmem>>, vector<256x256xbf16>
    %cst_7 = arith.constant dense<0.000000e+00> : vector<8x256xf32>
    %26 = tpu.matmul %24, %25, %cst_7 {dimension_numbers = #tpu.dot_dimension_numbers<[1], [0], [0], [1], [0, 0, 1, 1], [], []>} : vector<8x256xbf16>, vector<256x256xbf16>, vector<8x256xf32> -> vector<8x256xf32>
    %c0_8 = arith.constant 0 : index
    %c0_9 = arith.constant 0 : index
    %27 = vector.load %arg5[%c0_8, %c0_9] : memref<1x256xf32, #tpu.memory_space<vmem>>, vector<1x256xf32>
    %28 = vector.broadcast %27 : vector<1x256xf32> to vector<8x256xf32>
    %29 = arith.addf %26, %28 : vector<8x256xf32>
    %cst_10 = arith.constant 0.000000e+00 : f32
    %30 = vector.broadcast %cst_10 : f32 to vector<8x256xf32>
    %31 = arith.maximumf %29, %30 : vector<8x256xf32>
    %32 = arith.truncf %31 : vector<8x256xf32> to vector<8x256xbf16>
    %c0_11 = arith.constant 0 : index
    %c0_12 = arith.constant 0 : index
    %33 = vector.load %arg6[%c0_11, %c0_12] : memref<256x128xbf16, #tpu.memory_space<vmem>>, vector<256x128xbf16>
    %cst_13 = arith.constant dense<0.000000e+00> : vector<8x128xf32>
    %34 = tpu.matmul %32, %33, %cst_13 {dimension_numbers = #tpu.dot_dimension_numbers<[1], [0], [0], [1], [0, 0, 1, 1], [], []>} : vector<8x256xbf16>, vector<256x128xbf16>, vector<8x128xf32> -> vector<8x128xf32>
    %c0_14 = arith.constant 0 : index
    %c0_15 = arith.constant 0 : index
    %35 = vector.load %arg7[%c0_14, %c0_15] : memref<1x128xf32, #tpu.memory_space<vmem>>, vector<1x128xf32>
    %36 = vector.broadcast %35 : vector<1x128xf32> to vector<8x128xf32>
    %37 = arith.addf %34, %36 : vector<8x128xf32>
    %38 = vector.extract_strided_slice %37 {offsets = [0, 0], sizes = [8, 3], strides = [1, 1]} : vector<8x128xf32> to vector<8x3xf32>
    %c0_16 = arith.constant 0 : index
    %c0_17 = arith.constant 0 : index
    %39 = vector.load %arg8[%c0_16, %c0_17] : memref<8x3xf32, #tpu.memory_space<vmem>>, vector<8x3xf32>
    tpu.vector_store %arg8[%c0_16, %c0_17], %38 {strides = array<i32>} : memref<8x3xf32, #tpu.memory_space<vmem>>, vector<8x3xf32>,
    return
  }
  func.func @transform_0(%arg0: i32) -> (i32, i32) {
    %c0_i32 = arith.constant 0 : i32
    %c0_i32_0 = arith.constant 0 : i32
    return %arg0, %c0_i32 : i32, i32
  }
  func.func @transform_1(%arg0: i32) -> (i32, i32) {
    %c0_i32 = arith.constant 0 : i32
    %c0_i32_0 = arith.constant 0 : i32
    %c0_i32_1 = arith.constant 0 : i32
    return %c0_i32, %c0_i32_0 : i32, i32
  }
  func.func @transform_2(%arg0: i32) -> (i32, i32) {
    %c0_i32 = arith.constant 0 : i32
    %c0_i32_0 = arith.constant 0 : i32
    %c0_i32_1 = arith.constant 0 : i32
    return %c0_i32, %c0_i32_0 : i32, i32
  }
  func.func @transform_3(%arg0: i32) -> (i32, i32) {
    %c0_i32 = arith.constant 0 : i32
    %c0_i32_0 = arith.constant 0 : i32
    %c0_i32_1 = arith.constant 0 : i32
    return %c0_i32, %c0_i32_0 : i32, i32
  }
  func.func @transform_4(%arg0: i32) -> (i32, i32) {
    %c0_i32 = arith.constant 0 : i32
    %c0_i32_0 = arith.constant 0 : i32
    %c0_i32_1 = arith.constant 0 : i32
    return %c0_i32, %c0_i32_0 : i32, i32
  }
  func.func @transform_5(%arg0: i32) -> (i32, i32) {
    %c0_i32 = arith.constant 0 : i32
    %c0_i32_0 = arith.constant 0 : i32
    %c0_i32_1 = arith.constant 0 : i32
    return %c0_i32, %c0_i32_0 : i32, i32
  }
  func.func @transform_6(%arg0: i32) -> (i32, i32) {
    %c0_i32 = arith.constant 0 : i32
    %c0_i32_0 = arith.constant 0 : i32
    %c0_i32_1 = arith.constant 0 : i32
    return %c0_i32, %c0_i32_0 : i32, i32
  }
  func.func @transform_7(%arg0: i32) -> (i32, i32) {
    %c0_i32 = arith.constant 0 : i32
    %c0_i32_0 = arith.constant 0 : i32
    return %arg0, %c0_i32 : i32, i32
  }
}

</mosaic_0001>

<llo_original>
// kernel: tpu_custom_call.1
$region0: #{tpu_custom_call.1}
  #allocation0 [shape = 'u32[]', space=smem, size = 0x4, offset = 0x4, fixed_abs, tag = 'smem constant byte address 0x4 - core index']
  #allocation1 [shape = 'u32[144,128]{1,0:T(1,128)}', space=vmem, size = 0x12000, scoped, tag = 'internal scratch']
  %s0 = inlined_call_operand.vmem [shape: f32[8,3], index: 0, kind: input, shape index: {}]
  %s1 = inlined_call_operand.vmem [shape: f32[3,256], index: 1, kind: input, shape index: {}]
  %s2 = inlined_call_operand.vmem [shape: f32[1,256], index: 2, kind: input, shape index: {}]
  %s3 = inlined_call_operand.hbm [shape: bf16[256,256], index: 3, kind: input, shape index: {}]
  %s4 = inlined_call_operand.vmem [shape: f32[1,256], index: 4, kind: input, shape index: {}]
  %s5 = inlined_call_operand.hbm [shape: bf16[256,128], index: 5, kind: input, shape index: {}]
  %s6 = inlined_call_operand.vmem [shape: f32[1,128], index: 6, kind: input, shape index: {}]
  %s7 = inlined_call_operand.vmem [shape: f32[8,3], index: 7, kind: output, shape index: {}]
  %s8 = sld [smem:[#allocation0]]
  $region46: #{tpu_custom_call.1} parent=0
    _
  %s10 = ssub.s32 1, %s8
  %s11 = scalar_select 0, %s10, %s8
  $region1: #{tpu_custom_call.1} parent=0
    #allocation2 [shape = 'u8[131072]{0}', space=vmem, size = 0x20000, scoped, tag = 'input window, operand 3, single buffered']
    #allocation3 [shape = 's32[1]{0}', space=sflag, size = 0x4, scoped, tag = 'scoped memory for tpu_custom_call.1']
    #allocation4 [shape = 'u8[65536]{0}', space=vmem, size = 0x10000, scoped, tag = 'input window, operand 5, single buffered']
    #allocation5 [shape = 's32[1]{0}', space=sflag, size = 0x4, scoped, tag = 'scoped memory for tpu_custom_call.1']
    %12 = vsyncpa [#allocation3], 0
    %13 = vsyncpa [#allocation5], 0
    // Predicated region
    $region2: #{tpu_custom_call.1} parent=1 // pred_check
      _
    $region3: #{tpu_custom_call.1} parent=1 // pred_check_branch
      %15 = sbr.rel (0) target = $region5
    $region4: #{tpu_custom_call.1} parent=1 // pred_region
      _
    $region5: #{tpu_custom_call.1} parent=1 // pred_fallthru
      _
    // Predicated region
    $region6: #{tpu_custom_call.1} parent=1 // pred_check
      _
    $region7: #{tpu_custom_call.1} parent=1 // pred_check_branch
      %17 = sbr.rel (0) target = $region9
    $region8: #{tpu_custom_call.1} parent=1 // pred_region
      _
    $region9: #{tpu_custom_call.1} parent=1 // pred_fallthru
      _
    // Predicated region
    $region10: #{tpu_custom_call.1} parent=1 // pred_check
      _
    $region11: #{tpu_custom_call.1} parent=1 // pred_check_branch
      %19 = sbr.rel (0) target = $region13
    $region12: #{tpu_custom_call.1} parent=1 // pred_region
      _
    $region13: #{tpu_custom_call.1} parent=1 // pred_fallthru
      _
    // Predicated region
    $region14: #{tpu_custom_call.1} parent=1 // pred_check
      _
    $region15: #{tpu_custom_call.1} parent=1 // pred_check_branch
      %21 = sbr.rel (0) target = $region17
    $region16: #{tpu_custom_call.1} parent=1 // pred_region
      %s23 = ssub.s32 4096, 4096
      %24 = vsyncadd [#allocation3], %s23
      %s25 = sshll.u32 [#allocation2], 4
      %s26 = int_to_ptr.vmem [resolvable:$true] %s25
      %31 = dma.hbm_to_vmem [thread:$0]  %s3, 4096, %s26, [#allocation3], 128, 128, 8
    $region17: #{tpu_custom_call.1} parent=1 // pred_fallthru
      _
    // Predicated region
    $region18: #{tpu_custom_call.1} parent=1 // pred_check
      _
    $region19: #{tpu_custom_call.1} parent=1 // pred_check_branch
      %33 = sbr.rel (0) target = $region21
    $region20: #{tpu_custom_call.1} parent=1 // pred_region
      _
    $region21: #{tpu_custom_call.1} parent=1 // pred_fallthru
      _
    // Predicated region
    $region22: #{tpu_custom_call.1} parent=1 // pred_check
      _
    $region23: #{tpu_custom_call.1} parent=1 // pred_check_branch
      %35 = sbr.rel (0) target = $region25
    $region24: #{tpu_custom_call.1} parent=1 // pred_region
      %s37 = ssub.s32 2048, 2048
      %38 = vsyncadd [#allocation5], %s37
      %s39 = sshll.u32 [#allocation4], 4
      %s40 = int_to_ptr.vmem [resolvable:$true] %s39
      %45 = dma.hbm_to_vmem [thread:$0]  %s5, 2048, %s40, [#allocation5], 64, 64, 4
    $region25: #{tpu_custom_call.1} parent=1 // pred_fallthru
      _
    // Predicated region
    $region26: #{tpu_custom_call.1} parent=1 // pred_check
      _
    $region27: #{tpu_custom_call.1} parent=1 // pred_check_branch
      %47 = sbr.rel (0) target = $region29
    $region28: #{tpu_custom_call.1} parent=1 // pred_region
      _
    $region29: #{tpu_custom_call.1} parent=1 // pred_fallthru
      _
    // Predicated region
    $region30: #{tpu_custom_call.1} parent=1 // pred_check
      _
    $region31: #{tpu_custom_call.1} parent=1 // pred_check_branch
      %49 = sbr.rel (0) target = $region33
    $region32: #{tpu_custom_call.1} parent=1 // pred_region
      %50 = dma.done [#allocation3], 4096
    $region33: #{tpu_custom_call.1} parent=1 // pred_fallthru
      _
    // Predicated region
    $region34: #{tpu_custom_call.1} parent=1 // pred_check
      _
    $region35: #{tpu_custom_call.1} parent=1 // pred_check_branch
      %52 = sbr.rel (0) target = $region37
    $region36: #{tpu_custom_call.1} parent=1 // pred_region
      %53 = dma.done [#allocation5], 2048
    $region37: #{tpu_custom_call.1} parent=1 // pred_fallthru
      _
    %v55 = vld [vmem:[%s0] sm:$0xff]
    %v56 = vld [vmem:[%s1] sm:$0x77]
    %v57 = vld [vmem:[%s2] sm:$0x3]
    %59 = vset.pattern.permute.xlu0 0
    %60 = vperm.xlu0 %59, %v55
    %v61 = vpop.permute.xlu0 %60
    %v64 = vlaneseq
    %v65 = vshrl.u32 %v64, 7
    %v66 = vsub.s32 0, %v65
    %v67 = vrot.slane %v56, %v66
    %v68 = vlaneseq
    %v69 = vshrl.u32 %v68, 7
    %v70 = vsub.s32 4, %v69
    %v71 = vrot.slane %v56, %v70
    %v74 = vlaneseq
    %v75 = vshrl.u32 %v74, 7
    %v76 = vsub.s32 0, %v75
    %v77 = vrot.slane %v67, %v76
    %v78 = vlaneseq
    %v79 = vshrl.u32 %v78, 7
    %v80 = vsub.s32 0, %v79
    %v81 = vrot.slane %v71, %v80
    %v82 = vmul.f32 %v61, %v77
    %v83 = vmul.f32 %v61, %v81
    %v85 = vlaneseq
    %v86 = vshrl.u32 %v85, 7
    %v87 = vsub.s32 0, %v86
    %v88 = vrot.slane %v57, %v87
    %v89 = vlaneseq
    %v90 = vshrl.u32 %v89, 7
    %v91 = vsub.s32 1, %v90
    %v92 = vrot.slane %v57, %v91
    %v95 = vadd.f32 %v88, %v82
    %v96 = vadd.f32 %v92, %v83
    %97 = vset.pattern.permute.xlu0 1
    %98 = vperm.xlu0 %97, %v55
    %v99 = vpop.permute.xlu0 %98
    %v101 = vlaneseq
    %v102 = vshrl.u32 %v101, 7
    %v103 = vsub.s32 1, %v102
    %v104 = vrot.slane %v56, %v103
    %v105 = vlaneseq
    %v106 = vshrl.u32 %v105, 7
    %v107 = vsub.s32 5, %v106
    %v108 = vrot.slane %v56, %v107
    %v111 = vlaneseq
    %v112 = vshrl.u32 %v111, 7
    %v113 = vsub.s32 1, %v112
    %v114 = vrot.slane %v104, %v113
    %v115 = vlaneseq
    %v116 = vshrl.u32 %v115, 7
    %v117 = vsub.s32 1, %v116
    %v118 = vrot.slane %v108, %v117
    %v119 = vmul.f32 %v99, %v114
    %v120 = vmul.f32 %v99, %v118
    %v121 = vadd.f32 %v95, %v119
    %v122 = vadd.f32 %v96, %v120
    %123 = vset.pattern.permute.xlu0 2
    %124 = vperm.xlu0 %123, %v55
    %v125 = vpop.permute.xlu0 %124
    %v127 = vlaneseq
    %v128 = vshrl.u32 %v127, 7
    %v129 = vsub.s32 2, %v128
    %v130 = vrot.slane %v56, %v129
    %v131 = vlaneseq
    %v132 = vshrl.u32 %v131, 7
    %v133 = vsub.s32 6, %v132
    %v134 = vrot.slane %v56, %v133
    %v137 = vlaneseq
    %v138 = vshrl.u32 %v137, 7
    %v139 = vsub.s32 2, %v138
    %v140 = vrot.slane %v130, %v139
    %v141 = vlaneseq
    %v142 = vshrl.u32 %v141, 7
    %v143 = vsub.s32 2, %v142
    %v144 = vrot.slane %v134, %v143
    %v145 = vmul.f32 %v125, %v140
    %v146 = vmul.f32 %v125, %v144
    %v147 = vadd.f32 %v121, %v145
    %v148 = vadd.f32 %v122, %v146
    %v149 = vmax.f32 %v147, 0.0
    %v150 = vmax.f32 %v148, 0.0
    %v151 = vpack.c.bf16 %v149, %v149
    %v152 = vpack.c.bf16 %v150, %v150
    %v153 = vld [vmem:[#allocation2] sm:$0xff]
    %v154 = vld [vmem:[#allocation2 + $0x8] sm:$0xff]
    %v155 = vld [vmem:[#allocation2 + $0x10] sm:$0xff]
    %v156 = vld [vmem:[#allocation2 + $0x18] sm:$0xff]
    %v157 = vld [vmem:[#allocation2 + $0x20] sm:$0xff]
    %v158 = vld [vmem:[#allocation2 + $0x28] sm:$0xff]
    %v159 = vld [vmem:[#allocation2 + $0x30] sm:$0xff]
    %v160 = vld [vmem:[#allocation2 + $0x38] sm:$0xff]
    %v161 = vld [vmem:[#allocation2 + $0x40] sm:$0xff]
    %v162 = vld [vmem:[#allocation2 + $0x48] sm:$0xff]
    %v163 = vld [vmem:[#allocation2 + $0x50] sm:$0xff]
    %v164 = vld [vmem:[#allocation2 + $0x58] sm:$0xff]
    %v165 = vld [vmem:[#allocation2 + $0x60] sm:$0xff]
    %v166 = vld [vmem:[#allocation2 + $0x68] sm:$0xff]
    %v167 = vld [vmem:[#allocation2 + $0x70] sm:$0xff]
    %v168 = vld [vmem:[#allocation2 + $0x78] sm:$0xff]
    %v169 = vld [vmem:[#allocation2 + $0x80] sm:$0xff]
    %v170 = vld [vmem:[#allocation2 + $0x88] sm:$0xff]
    %v171 = vld [vmem:[#allocation2 + $0x90] sm:$0xff]
    %v172 = vld [vmem:[#allocation2 + $0x98] sm:$0xff]
    %v173 = vld [vmem:[#allocation2 + $0xa0] sm:$0xff]
    %v174 = vld [vmem:[#allocation2 + $0xa8] sm:$0xff]
    %v175 = vld [vmem:[#allocation2 + $0xb0] sm:$0xff]
    %v176 = vld [vmem:[#allocation2 + $0xb8] sm:$0xff]
    %v177 = vld [vmem:[#allocation2 + $0xc0] sm:$0xff]
    %v178 = vld [vmem:[#allocation2 + $0xc8] sm:$0xff]
    %v179 = vld [vmem:[#allocation2 + $0xd0] sm:$0xff]
    %v180 = vld [vmem:[#allocation2 + $0xd8] sm:$0xff]
    %v181 = vld [vmem:[#allocation2 + $0xe0] sm:$0xff]
    %v182 = vld [vmem:[#allocation2 + $0xe8] sm:$0xff]
    %v183 = vld [vmem:[#allocation2 + $0xf0] sm:$0xff]
    %v184 = vld [vmem:[#allocation2 + $0xf8] sm:$0xff]
    %v185 = vld [vmem:[%s4] sm:$0x3]
    %v187 = vlaneseq
    %v188 = vshrl.u32 %v187, 7
    %v189 = vsub.s32 0, %v188
    %v190 = vrot.slane %v185, %v189
    %v191 = vlaneseq
    %v192 = vshrl.u32 %v191, 7
    %v193 = vsub.s32 1, %v192
    %v194 = vrot.slane %v185, %v193
    %v229 = vunpack.c.l.b16 %v153
    %v230 = vunpack.c.h.b16 %v153
    %v231 = vunpack.c.l.b16 %v154
    %v232 = vunpack.c.h.b16 %v154
    %v233 = vunpack.c.l.b16 %v155
    %v234 = vunpack.c.h.b16 %v155
    %v235 = vunpack.c.l.b16 %v156
    %v236 = vunpack.c.h.b16 %v156
    %v237 = vunpack.c.l.b16 %v157
    %v238 = vunpack.c.h.b16 %v157
    %v239 = vunpack.c.l.b16 %v158
    %v240 = vunpack.c.h.b16 %v158
    %v241 = vunpack.c.l.b16 %v159
    %v242 = vunpack.c.h.b16 %v159
    %v243 = vunpack.c.l.b16 %v160
    %v244 = vunpack.c.h.b16 %v160
    %v245 = vunpack.c.l.b16 %v161
    %v246 = vunpack.c.h.b16 %v161
    %v247 = vunpack.c.l.b16 %v162
    %v248 = vunpack.c.h.b16 %v162
    %v249 = vunpack.c.l.b16 %v163
    %v250 = vunpack.c.h.b16 %v163
    %v251 = vunpack.c.l.b16 %v164
    %v252 = vunpack.c.h.b16 %v164
    %v253 = vunpack.c.l.b16 %v165
    %v254 = vunpack.c.h.b16 %v165
    %v255 = vunpack.c.l.b16 %v166
    %v256 = vunpack.c.h.b16 %v166
    %v257 = vunpack.c.l.b16 %v167
    %v258 = vunpack.c.h.b16 %v167
    %v259 = vunpack.c.l.b16 %v168
    %v260 = vunpack.c.h.b16 %v168
    %v261 = vunpack.c.l.b16 %v169
    %v262 = vunpack.c.h.b16 %v169
    %v263 = vunpack.c.l.b16 %v170
    %v264 = vunpack.c.h.b16 %v170
    %v265 = vunpack.c.l.b16 %v171
    %v266 = vunpack.c.h.b16 %v171
    %v267 = vunpack.c.l.b16 %v172
    %v268 = vunpack.c.h.b16 %v172
    %v269 = vunpack.c.l.b16 %v173
    %v270 = vunpack.c.h.b16 %v173
    %v271 = vunpack.c.l.b16 %v174
    %v272 = vunpack.c.h.b16 %v174
    %v273 = vunpack.c.l.b16 %v175
    %v274 = vunpack.c.h.b16 %v175
    %v275 = vunpack.c.l.b16 %v176
    %v276 = vunpack.c.h.b16 %v176
    %v277 = vunpack.c.l.b16 %v177
    %v278 = vunpack.c.h.b16 %v177
    %v279 = vunpack.c.l.b16 %v178
    %v280 = vunpack.c.h.b16 %v178
    %v281 = vunpack.c.l.b16 %v179
    %v282 = vunpack.c.h.b16 %v179
    %v283 = vunpack.c.l.b16 %v180
    %v284 = vunpack.c.h.b16 %v180
    %v285 = vunpack.c.l.b16 %v181
    %v286 = vunpack.c.h.b16 %v181
    %v287 = vunpack.c.l.b16 %v182
    %v288 = vunpack.c.h.b16 %v182
    %v289 = vunpack.c.l.b16 %v183
    %v290 = vunpack.c.h.b16 %v183
    %v291 = vunpack.c.l.b16 %v184
    %v292 = vunpack.c.h.b16 %v184
    %v293 = vpack.c.b16 %v231, %v229
    %v294 = vpack.c.b16 %v232, %v230
    %v295 = vpack.c.b16 %v235, %v233
    %v296 = vpack.c.b16 %v236, %v234
    %v297 = vpack.c.b16 %v239, %v237
    %v298 = vpack.c.b16 %v240, %v238
    %v299 = vpack.c.b16 %v243, %v241
    %v300 = vpack.c.b16 %v244, %v242
    %v301 = vpack.c.b16 %v247, %v245
    %v302 = vpack.c.b16 %v248, %v246
    %v303 = vpack.c.b16 %v251, %v249
    %v304 = vpack.c.b16 %v252, %v250
    %v305 = vpack.c.b16 %v255, %v253
    %v306 = vpack.c.b16 %v256, %v254
    %v307 = vpack.c.b16 %v259, %v257
    %v308 = vpack.c.b16 %v260, %v258
    %v309 = vpack.c.b16 %v263, %v261
    %v310 = vpack.c.b16 %v264, %v262
    %v311 = vpack.c.b16 %v267, %v265
    %v312 = vpack.c.b16 %v268, %v266
    %v313 = vpack.c.b16 %v271, %v269
    %v314 = vpack.c.b16 %v272, %v270
    %v315 = vpack.c.b16 %v275, %v273
    %v316 = vpack.c.b16 %v276, %v274
    %v317 = vpack.c.b16 %v279, %v277
    %v318 = vpack.c.b16 %v280, %v278
    %v319 = vpack.c.b16 %v283, %v281
    %v320 = vpack.c.b16 %v284, %v282
    %v321 = vpack.c.b16 %v287, %v285
    %v322 = vpack.c.b16 %v288, %v286
    %v323 = vpack.c.b16 %v291, %v289
    %v324 = vpack.c.b16 %v292, %v290
    %357 = vmatprep.subr.bf16.mxu0 %v294
    %358 = vmatpush1.bf16.msra.mxu0 %v293
    %359 = vmatprep.subr.bf16.mxu0 %v296
    %360 = vmatpush1.bf16.msra.mxu0 %v295
    %361 = vmatprep.subr.bf16.mxu0 %v298
    %362 = vmatpush1.bf16.msra.mxu0 %v297
    %363 = vmatprep.subr.bf16.mxu0 %v300
    %364 = vmatpush1.bf16.msra.mxu0 %v299
    %365 = vmatprep.subr.bf16.mxu0 %v302
    %366 = vmatpush1.bf16.msra.mxu0 %v301
    %367 = vmatprep.subr.bf16.mxu0 %v304
    %368 = vmatpush1.bf16.msra.mxu0 %v303
    %369 = vmatprep.subr.bf16.mxu0 %v306
    %370 = vmatpush1.bf16.msra.mxu0 %v305
    %371 = vmatprep.subr.bf16.mxu0 %v308
    %372 = vmatpush1.bf16.msra.mxu0 %v307
    %373 = vmatprep.subr.bf16.mxu0 %v310
    %374 = vmatpush1.bf16.msra.mxu0 %v309
    %375 = vmatprep.subr.bf16.mxu0 %v312
    %376 = vmatpush1.bf16.msra.mxu0 %v311
    %377 = vmatprep.subr.bf16.mxu0 %v314
    %378 = vmatpush1.bf16.msra.mxu0 %v313
    %379 = vmatprep.subr.bf16.mxu0 %v316
    %380 = vmatpush1.bf16.msra.mxu0 %v315
    %381 = vmatprep.subr.bf16.mxu0 %v318
    %382 = vmatpush1.bf16.msra.mxu0 %v317
    %383 = vmatprep.subr.bf16.mxu0 %v320
    %384 = vmatpush1.bf16.msra.mxu0 %v319
    %385 = vmatprep.subr.bf16.mxu0 %v322
    %386 = vmatpush1.bf16.msra.mxu0 %v321
    %387 = vmatprep.subr.bf16.mxu0 %v324
    %388 = vmatpush1.bf16.msra.mxu0 %v323
    %389 = vmatprep.mubr.bf16.mxu0 %v152
    %390 = vmatmul.mubr.bf16.gmra.mrb[0].mxu0 %v151
    %v391 = vpop.f32.mrb[0].mxu0
    %v392 = vadd.f32 %v190, %v391
    %v393 = vpop.f32.mrb[0].mxu0
    %v394 = vadd.f32 %v194, %v393
    %v395 = vpop.f32.mrb[0].mxu0
    %v396 = vpop.f32.mrb[0].mxu0
    %397 = vdwg.mxu0
    %v398 = vmax.f32 %v392, 0.0
    %v399 = vmax.f32 %v394, 0.0
    %v400 = vpack.c.bf16 %v398, %v398
    %v401 = vpack.c.bf16 %v399, %v399
    %v402 = vld [vmem:[#allocation4] sm:$0xf]
    %v403 = vld [vmem:[#allocation4 + $0x4] sm:$0xf]
    %v404 = vld [vmem:[#allocation4 + $0x8] sm:$0xf]
    %v405 = vld [vmem:[#allocation4 + $0xc] sm:$0xf]
    %v406 = vld [vmem:[#allocation4 + $0x10] sm:$0xf]
    %v407 = vld [vmem:[#allocation4 + $0x14] sm:$0xf]
    %v408 = vld [vmem:[#allocation4 + $0x18] sm:$0xf]
    %v409 = vld [vmem:[#allocation4 + $0x1c] sm:$0xf]
    %v410 = vld [vmem:[#allocation4 + $0x20] sm:$0xf]
    %v411 = vld [vmem:[#allocation4 + $0x24] sm:$0xf]
    %v412 = vld [vmem:[#allocation4 + $0x28] sm:$0xf]
    %v413 = vld [vmem:[#allocation4 + $0x2c] sm:$0xf]
    %v414 = vld [vmem:[#allocation4 + $0x30] sm:$0xf]
    %v415 = vld [vmem:[#allocation4 + $0x34] sm:$0xf]
    %v416 = vld [vmem:[#allocation4 + $0x38] sm:$0xf]
    %v417 = vld [vmem:[#allocation4 + $0x3c] sm:$0xf]
    %v418 = vld [vmem:[#allocation4 + $0x40] sm:$0xf]
    %v419 = vld [vmem:[#allocation4 + $0x44] sm:$0xf]
    %v420 = vld [vmem:[#allocation4 + $0x48] sm:$0xf]
    %v421 = vld [vmem:[#allocation4 + $0x4c] sm:$0xf]
    %v422 = vld [vmem:[#allocation4 + $0x50] sm:$0xf]
    %v423 = vld [vmem:[#allocation4 + $0x54] sm:$0xf]
    %v424 = vld [vmem:[#allocation4 + $0x58] sm:$0xf]
    %v425 = vld [vmem:[#allocation4 + $0x5c] sm:$0xf]
    %v426 = vld [vmem:[#allocation4 + $0x60] sm:$0xf]
    %v427 = vld [vmem:[#allocation4 + $0x64] sm:$0xf]
    %v428 = vld [vmem:[#allocation4 + $0x68] sm:$0xf]
    %v429 = vld [vmem:[#allocation4 + $0x6c] sm:$0xf]
    %v430 = vld [vmem:[#allocation4 + $0x70] sm:$0xf]
    %v431 = vld [vmem:[#allocation4 + $0x74] sm:$0xf]
    %v432 = vld [vmem:[#allocation4 + $0x78] sm:$0xf]
    %v433 = vld [vmem:[#allocation4 + $0x7c] sm:$0xf]
    %v434 = vld [vmem:[%s6] sm:$0x1]
    %v436 = vlaneseq
    %v437 = vshrl.u32 %v436, 7
    %v438 = vsub.s32 0, %v437
    %v439 = vrot.slane %v434, %v438
    %v473 = vunpack.c.l.b16 %v402
    %v474 = vunpack.c.l.b16 %v403
    %v475 = vunpack.c.l.b16 %v404
    %v476 = vunpack.c.l.b16 %v405
    %v477 = vunpack.c.l.b16 %v406
    %v478 = vunpack.c.l.b16 %v407
    %v479 = vunpack.c.l.b16 %v408
    %v480 = vunpack.c.l.b16 %v409
    %v481 = vunpack.c.l.b16 %v410
    %v482 = vunpack.c.l.b16 %v411
    %v483 = vunpack.c.l.b16 %v412
    %v484 = vunpack.c.l.b16 %v413
    %v485 = vunpack.c.l.b16 %v414
    %v486 = vunpack.c.l.b16 %v415
    %v487 = vunpack.c.l.b16 %v416
    %v488 = vunpack.c.l.b16 %v417
    %v489 = vunpack.c.l.b16 %v418
    %v490 = vunpack.c.l.b16 %v419
    %v491 = vunpack.c.l.b16 %v420
    %v492 = vunpack.c.l.b16 %v421
    %v493 = vunpack.c.l.b16 %v422
    %v494 = vunpack.c.l.b16 %v423
    %v495 = vunpack.c.l.b16 %v424
    %v496 = vunpack.c.l.b16 %v425
    %v497 = vunpack.c.l.b16 %v426
    %v498 = vunpack.c.l.b16 %v427
    %v499 = vunpack.c.l.b16 %v428
    %v500 = vunpack.c.l.b16 %v429
    %v501 = vunpack.c.l.b16 %v430
    %v502 = vunpack.c.l.b16 %v431
    %v503 = vunpack.c.l.b16 %v432
    %v504 = vunpack.c.l.b16 %v433
    %v505 = vpack.c.b16 %v474, %v473
    %v506 = vpack.c.b16 %v476, %v475
    %v507 = vpack.c.b16 %v478, %v477
    %v508 = vpack.c.b16 %v480, %v479
    %v509 = vpack.c.b16 %v482, %v481
    %v510 = vpack.c.b16 %v484, %v483
    %v511 = vpack.c.b16 %v486, %v485
    %v512 = vpack.c.b16 %v488, %v487
    %v513 = vpack.c.b16 %v490, %v489
    %v514 = vpack.c.b16 %v492, %v491
    %v515 = vpack.c.b16 %v494, %v493
    %v516 = vpack.c.b16 %v496, %v495
    %v517 = vpack.c.b16 %v498, %v497
    %v518 = vpack.c.b16 %v500, %v499
    %v519 = vpack.c.b16 %v502, %v501
    %v520 = vpack.c.b16 %v504, %v503
    %537 = vmatprep.subr.bf16.mxu0 0
    %538 = vmatpush1.bf16.msra.mxu0 %v505
    %539 = vmatprep.subr.bf16.mxu0 0
    %540 = vmatpush1.bf16.msra.mxu0 %v506
    %541 = vmatprep.subr.bf16.mxu0 0
    %542 = vmatpush1.bf16.msra.mxu0 %v507
    %543 = vmatprep.subr.bf16.mxu0 0
    %544 = vmatpush1.bf16.msra.mxu0 %v508
    %545 = vmatprep.subr.bf16.mxu0 0
    %546 = vmatpush1.bf16.msra.mxu0 %v509
    %547 = vmatprep.subr.bf16.mxu0 0
    %548 = vmatpush1.bf16.msra.mxu0 %v510
    %549 = vmatprep.subr.bf16.mxu0 0
    %550 = vmatpush1.bf16.msra.mxu0 %v511
    %551 = vmatprep.subr.bf16.mxu0 0
    %552 = vmatpush1.bf16.msra.mxu0 %v512
    %553 = vmatprep.subr.bf16.mxu0 0
    %554 = vmatpush1.bf16.msra.mxu0 %v513
    %555 = vmatprep.subr.bf16.mxu0 0
    %556 = vmatpush1.bf16.msra.mxu0 %v514
    %557 = vmatprep.subr.bf16.mxu0 0
    %558 = vmatpush1.bf16.msra.mxu0 %v515
    %559 = vmatprep.subr.bf16.mxu0 0
    %560 = vmatpush1.bf16.msra.mxu0 %v516
    %561 = vmatprep.subr.bf16.mxu0 0
    %562 = vmatpush1.bf16.msra.mxu0 %v517
    %563 = vmatprep.subr.bf16.mxu0 0
    %564 = vmatpush1.bf16.msra.mxu0 %v518
    %565 = vmatprep.subr.bf16.mxu0 0
    %566 = vmatpush1.bf16.msra.mxu0 %v519
    %567 = vmatprep.subr.bf16.mxu0 0
    %568 = vmatpush1.bf16.msra.mxu0 %v520
    %569 = vmatprep.mubr.bf16.mxu0 %v401
    %570 = vmatmul.mubr.bf16.gmra.mrb[0].mxu0 %v400
    %v571 = vpop.f32.mrb[0].mxu0
    %v572 = vadd.f32 %v439, %v571
    %v573 = vpop.f32.mrb[0].mxu0
    %v574 = vpop.f32.mrb[0].mxu0
    %v575 = vpop.f32.mrb[0].mxu0
    %576 = vdwg.mxu0
    %vm577 = vcmask 23552
    %578 = vst.msk [vmem:[%s7] sm:$0xff] %vm577, %v572
    // Predicated region
    $region38: #{tpu_custom_call.1} parent=1 // pred_check
      _
    $region39: #{tpu_custom_call.1} parent=1 // pred_check_branch
      %580 = sbr.rel (0) target = $region41
    $region40: #{tpu_custom_call.1} parent=1 // pred_region
      _
    $region41: #{tpu_custom_call.1} parent=1 // pred_fallthru
      _
    // Predicated region
    $region42: #{tpu_custom_call.1} parent=1 // pred_check
      _
    $region43: #{tpu_custom_call.1} parent=1 // pred_check_branch
      %582 = sbr.rel (0) target = $region45
    $region44: #{tpu_custom_call.1} parent=1 // pred_region
      _
    $region45: #{tpu_custom_call.1} parent=1 // pred_fallthru
      _
    %583 = vsyncpa [#allocation3], 1
    %584 = vsyncpa [#allocation5], 1

</llo_original>
